<compile_context>
chip_gen: v6e
topology: v6e:2x2x1
jax: 0.10.0
libtpu: 0.0.40
codegen_flags: <defaults>
</compile_context>

<pallas_src>
import jax
import jax.numpy as jnp
from jax import lax
from jax.experimental import pallas as pl
from jax.experimental.pallas import tpu as pltpu


# ----------------------------------------------------------------------------
# Pallas kernel: fused bidirectional masked LSTM over one T-chunk per grid step.
# ----------------------------------------------------------------------------
def _bilstm_kernel(x_ref, len_ref, w_in_ref, b_ref, w_rec_ref,
                   out_ref, h_ref, gx_ref, h_scr, c_scr):
    Tc, B, out_w = out_ref.shape          # chunk timesteps, batch, padded width
    H2 = h_scr.shape[-1]                  # 2H (both directions)
    chunk = pl.program_id(0)

    @pl.when(chunk == 0)
    def _():
        h_scr[...] = jnp.zeros_like(h_scr)
        c_scr[...] = jnp.zeros_like(c_scr)

    # Chunk-local hoisted input projection: one bf16 GEMM per chunk, off the
    # serial path.  The HBM DMA for the next chunk's x overlaps the recurrence
    # below via BlockSpec pipelining.
    gx_ref[...] = (jnp.dot(x_ref[...], w_in_ref[...],
                           preferred_element_type=jnp.float32)
                   + b_ref[...]).astype(jnp.bfloat16)        # (Tc*B, 8H) bf16

    w_rec = w_rec_ref[...]                # (2H, 8H) bf16
    lens = len_ref[...]                   # (B, 1) int32
    t0 = chunk * Tc
    pad_w = out_w - H2
    zero_pad = jnp.zeros((B, pad_w), jnp.float32) if pad_w else None  # hoisted

    def body(t, carry):
        h2, c2 = carry                    # (B, 2H) f32 each, [fwd | bwd]
        row = pl.multiple_of(t * B, B)
        gates = gx_ref[pl.ds(row, B), :].astype(jnp.float32) + jnp.dot(
            h2.astype(jnp.bfloat16), w_rec,
            preferred_element_type=jnp.float32)              # (B, 8H) f32

        # gate columns: [i_f,i_b, f_f,f_b, o_f,o_b, g_f,g_b]
        sig = jax.nn.sigmoid(gates[:, :3 * H2])              # sigmoid gates only
        i2 = sig[:, 0 * H2:1 * H2]
        f2 = sig[:, 1 * H2:2 * H2]
        o2 = sig[:, 2 * H2:3 * H2]
        g2 = jnp.tanh(gates[:, 3 * H2:])                     # tanh gate only

        c_new = f2 * c2 + i2 * g2
        h_new = o2 * jnp.tanh(c_new)

        m = lens > (t0 + t)                                  # (B, 1) bool
        h2 = jnp.where(m, h_new, h2)                         # freeze past length
        c2 = jnp.where(m, c_new, c2)

        h_out = jnp.where(m, h_new, 0.0)                     # padded output
        if pad_w:
            h_out = jnp.concatenate([h_out, zero_pad], axis=-1)  # lane-dense 128
        out_ref[t] = h_out
        return h2, c2

    h2, c2 = lax.fori_loop(0, Tc, body, (h_scr[...], c_scr[...]))
    h_scr[...] = h2
    c_scr[...] = c2

    @pl.when(chunk == pl.num_programs(0) - 1)
    def _():
        h_ref[...] = h2                                      # [h_fwd | h_bwd] last


def bilstm_pallas(x_fwd, x_rev, lengths, packed, chunk_t=4):
    """x_fwd/x_rev: (T, B, E) f32. Returns (of, orv, hf, hb) time-major."""
    T, B, E = x_fwd.shape
    H2, G = packed["w_rec"].shape         # 2H, 8H
    H = H2 // 2
    out_w = ((H2 + 127) // 128) * 128     # lane-dense output width

    chunk_t = min(chunk_t, T)
    nc = pl.cdiv(T, chunk_t)
    T_pad = nc * chunk_t

    x_cat = jnp.concatenate([x_fwd, x_rev], axis=-1)         # (T, B, 2E)
    if T_pad != T:
        x_cat = jnp.pad(x_cat, ((0, T_pad - T), (0, 0), (0, 0)))
    x_cat = x_cat.reshape(T_pad * B, 2 * E).astype(jnp.bfloat16)
    lens = lengths.reshape(B, 1).astype(jnp.int32)

    # T-chunked grid keeps VMEM residency O(chunk); no vmem_limit override needed.
    out2, hlast = pl.pallas_call(
        _bilstm_kernel,
        grid=(nc,),
        out_shape=(jax.ShapeDtypeStruct((T_pad, B, out_w), jnp.float32),
                   jax.ShapeDtypeStruct((B, H2), jnp.float32)),
        in_specs=[
            pl.BlockSpec((chunk_t * B, 2 * E), lambda c: (c, 0)),   # x chunk
            pl.BlockSpec((B, 1), lambda c: (0, 0)),                 # lengths
            pl.BlockSpec((2 * E, G), lambda c: (0, 0)),             # w_in
            pl.BlockSpec((1, G), lambda c: (0, 0)),                 # bias
            pl.BlockSpec((H2, G), lambda c: (0, 0)),                # w_rec
        ],
        out_specs=(
            pl.BlockSpec((chunk_t, B, out_w), lambda c: (c, 0, 0)), # per-step h
            pl.BlockSpec((B, H2), lambda c: (0, 0)),                # final h
        ),
        scratch_shapes=[
            pltpu.VMEM((chunk_t * B, G), jnp.bfloat16),   # gx chunk (bf16)
            pltpu.VMEM((B, H2), jnp.float32),             # h carry
            pltpu.VMEM((B, H2), jnp.float32),             # c carry
        ],
        compiler_params=pltpu.CompilerParams(
            dimension_semantics=("arbitrary",)),
    )(x_cat, lens, packed["w_in"], packed["b"], packed["w_rec"])

    out2 = out2[:T, :, :H2]
    return out2[..., :H], out2[..., H:], hlast[:, :H], hlast[:, H:]


# ----------------------------------------------------------------------------
# Pure-JAX reference (separate directions, f32) for correctness check.
# ----------------------------------------------------------------------------
def bilstm_scan(x_fwd, x_rev, mask, params):
    """mask: (T, B, 1) f32. Returns (of, orv, hf, hb) time-major."""
    H = params["w_hh_f"].shape[0]
    B = x_fwd.shape[1]

    def run(xs, w_ih, w_hh, b):
        def step(carry, inp):
            h, c = carry
            x_t, m = inp
            gates = x_t @ w_ih + h @ w_hh + b
            i = jax.nn.sigmoid(gates[:, :H])
            f = jax.nn.sigmoid(gates[:, H:2 * H])
            g = jnp.tanh(gates[:, 2 * H:3 * H])
            o = jax.nn.sigmoid(gates[:, 3 * H:])
            c_new = f * c + i * g
            h_new = o * jnp.tanh(c_new)
            h = m * h_new + (1.0 - m) * h
            c = m * c_new + (1.0 - m) * c
            return (h, c), m * h_new

        z = jnp.zeros((B, H), jnp.float32)
        (h, _), outs = lax.scan(step, (z, z), (xs, mask))
        return outs, h

    of, hf = run(x_fwd, params["w_ih_f"], params["w_hh_f"], params["b_f"])
    orv, hb = run(x_rev, params["w_ih_b"], params["w_hh_b"], params["b_b"])
    return of, orv, hf, hb


# ----------------------------------------------------------------------------
# Parameter packing: block-diagonal / gate-interleaved layout for the kernel.
# Column layout of the 8H gate axis: [i_f,i_b, f_f,f_b, o_f,o_b, g_f,g_b]
# (sigmoid gates contiguous first, tanh gate block last).
# ----------------------------------------------------------------------------
def _pack_bidir(p, E, H):
    zE = jnp.zeros((E, H), jnp.float32)
    zH = jnp.zeros((H, H), jnp.float32)
    win_cols, wrec_cols, b_cols = [], [], []
    for g in (0, 1, 3, 2):                     # PyTorch order [i,f,g,o] -> [i,f,o,g]
        sl = slice(g * H, (g + 1) * H)
        win_cols += [jnp.concatenate([p["w_ih_f"][:, sl], zE], axis=0),
                     jnp.concatenate([zE, p["w_ih_b"][:, sl]], axis=0)]
        wrec_cols += [jnp.concatenate([p["w_hh_f"][:, sl], zH], axis=0),
                      jnp.concatenate([zH, p["w_hh_b"][:, sl]], axis=0)]
        b_cols += [p["b_f"][:, sl], p["b_b"][:, sl]]
    return {
        "w_in": jnp.concatenate(win_cols, axis=1).astype(jnp.bfloat16),   # (2E, 8H)
        "b": jnp.concatenate(b_cols, axis=1),                             # (1, 8H) f32
        "w_rec": jnp.concatenate(wrec_cols, axis=1).astype(jnp.bfloat16), # (2H, 8H)
    }


# ----------------------------------------------------------------------------
# MultiLSTM (JAX / Pallas version)
# ----------------------------------------------------------------------------
class MultiLSTMPallas:
    def __init__(self, num_embeddings, embedding_dim, hidden_state_dim,
                 n_lstms=1, padding_idx=0, key=None):
        self.E = embedding_dim
        self.H = hidden_state_dim
        key = jax.random.PRNGKey(0) if key is None else key

        # Embedding weight, kaiming_uniform (fan_in = embedding_dim).
        # NOTE: like the PyTorch module, kaiming_uniform overwrites the zeroed
        # padding row; padded positions are masked out of the LSTM anyway.
        k_emb, key = jax.random.split(key)
        bound = (6.0 / embedding_dim) ** 0.5
        self.emb_weight = jax.random.uniform(
            k_emb, (num_embeddings, embedding_dim), jnp.float32, -bound, bound)

        # LSTM weights: PyTorch default uniform(-1/sqrt(H), 1/sqrt(H)),
        # gate order [i, f, g, o]; stored transposed for (x @ W) matmuls.
        s = 1.0 / (hidden_state_dim ** 0.5)
        self.lstm_params = []
        self.packed_params = []
        for _ in range(n_lstms):
            p = {}
            for d in ("f", "b"):
                key, k1, k2, k3, k4 = jax.random.split(key, 5)
                w_ih = jax.random.uniform(k1, (4 * self.H, self.E), jnp.float32, -s, s)
                w_hh = jax.random.uniform(k2, (4 * self.H, self.H), jnp.float32, -s, s)
                b_ih = jax.random.uniform(k3, (4 * self.H,), jnp.float32, -s, s)
                b_hh = jax.random.uniform(k4, (4 * self.H,), jnp.float32, -s, s)
                p["w_ih_" + d] = w_ih.T
                p["w_hh_" + d] = w_hh.T
                p["b_" + d] = (b_ih + b_hh).reshape(1, 4 * self.H)
            self.lstm_params.append(p)
            self.packed_params.append(_pack_bidir(p, self.E, self.H))

    def _forward_one(self, x, idx, use_pallas):
        # x: (B, T) int32 token ids, 0 = padding
        B, T = x.shape
        lengths = jnp.sum((x != 0).astype(jnp.int32), axis=1)          # (B,)
        emb = jnp.take(self.emb_weight, x, axis=0)                     # (B, T, E)
        # TODO(synk): nn.Dropout(p=0) is the identity; non-zero dropout not modeled.

        t_idx = jnp.arange(T)
        # reversed-compacted sequence: x_rev[b, t] = emb[b, len[b]-1-t] for t < len
        rev_idx = jnp.clip(lengths[:, None] - 1 - t_idx[None, :], 0, T - 1)  # (B, T)
        emb_rev = jnp.take_along_axis(emb, rev_idx[:, :, None], axis=1)
        mask_bt = (t_idx[None, :] < lengths[:, None]).astype(jnp.float32)    # (B, T)

        # time-major for the kernel
        x_fwd = jnp.transpose(emb, (1, 0, 2)).astype(jnp.float32)            # (T, B, E)
        x_rev = jnp.transpose(emb_rev, (1, 0, 2)).astype(jnp.float32)

        if use_pallas:
            of, orv, hf, hb = bilstm_pallas(x_fwd, x_rev, lengths,
                                            self.packed_params[idx])
        else:
            mask_tm = jnp.transpose(mask_bt)[:, :, None]                     # (T, B, 1)
            of, orv, hf, hb = bilstm_scan(x_fwd, x_rev, mask_tm,
                                          self.lstm_params[idx])

        of = jnp.transpose(of, (1, 0, 2))    # (B, T, H)
        orv = jnp.transpose(orv, (1, 0, 2))  # (B, T, H), reversed time order
        # scatter backward outputs back to original time positions
        ob = jnp.take_along_axis(orv, rev_idx[:, :, None], axis=1) * mask_bt[:, :, None]

        output = jnp.concatenate([of, ob], axis=-1)        # (B, T, 2H)
        last_output = jnp.concatenate([hf, hb], axis=-1)   # (B, 2H)

        # pad_packed_sequence pads only up to the max length in the batch.
        # TODO(synk): int() forces a host sync; keep full T if wrapping in jit.
        max_len = int(jnp.max(lengths))
        output = output[:, :max_len]
        # TODO(synk): zero-length sequences yield all-zero rows here, whereas
        #             PyTorch pack_padded_sequence would raise.
        return output, last_output

    def __call__(self, *xs, use_pallas=True):
        outputs = [self._forward_one(x, i, use_pallas) for i, x in enumerate(xs)]
        return outputs if len(outputs) > 1 else outputs[0]


if __name__ == "__main__":
    key = jax.random.PRNGKey(0)
    num_embeddings, E, H = 50, 16, 32
    B, T = 8, 8

    model = MultiLSTMPallas(num_embeddings, E, H, n_lstms=1, key=key)

    # deterministic example input: token ids in [1, num_embeddings), zero-padded tails
    k_tok = jax.random.fold_in(key, 123)
    toks = jax.random.randint(k_tok, (B, T), 1, num_embeddings)
    lens = jnp.array([8, 5, 3, 6, 8, 1, 7, 4], dtype=jnp.int32)
    valid = jnp.arange(T)[None, :] < lens[:, None]
    x = jnp.where(valid, toks, 0).astype(jnp.int32)

    output, last_output = model(x)
    jax.block_until_ready((output, last_output))

    # cross-check against a pure-JAX scan reference
    ref_output, ref_last = model(x, use_pallas=False)
    assert output.shape == ref_output.shape
    assert last_output.shape == ref_last.shape == (B, 2 * H)
    assert jnp.allclose(output, ref_output, atol=5e-2, rtol=5e-2)
    assert jnp.allclose(last_output, ref_last, atol=5e-2, rtol=5e-2)

    print("KERNEL_OK")
</pallas_src>

<mosaic_0001>
module attributes {stable_mosaic.version = 11 : i64} {
  func.func @_bilstm_kernel(%arg0: i32, %arg1: memref<32x32xbf16, #tpu.memory_space<vmem>>, %arg2: memref<8x1xi32, #tpu.memory_space<vmem>>, %arg3: memref<32x256xbf16, #tpu.memory_space<vmem>>, %arg4: memref<1x256xf32, #tpu.memory_space<vmem>>, %arg5: memref<64x256xbf16, #tpu.memory_space<vmem>>, %arg6: memref<4x8x128xf32, #tpu.memory_space<vmem>>, %arg7: memref<8x64xf32, #tpu.memory_space<vmem>>, %arg8: memref<32x256xbf16, #tpu.memory_space<vmem>>, %arg9: memref<8x64xf32, #tpu.memory_space<vmem>>, %arg10: memref<8x64xf32, #tpu.memory_space<vmem>>) attributes {dimension_semantics = [#tpu.dimension_semantics<arbitrary>], iteration_bounds = array<i64: 2>, scalar_prefetch = 0 : i64, scratch_operands = 3 : i64, tpu.core_type = #tpu.core_type<tc>, window_params = [{transform_indices = @transform_0, window_bounds = array<i64: 32, 32>}, {pipeline_mode = #tpu.pipeline_mode<synchronous>, transform_indices = @transform_1, window_bounds = array<i64: 8, 1>}, {pipeline_mode = #tpu.pipeline_mode<synchronous>, transform_indices = @transform_2, window_bounds = array<i64: 32, 256>}, {pipeline_mode = #tpu.pipeline_mode<synchronous>, transform_indices = @transform_3, window_bounds = array<i64: 1, 256>}, {pipeline_mode = #tpu.pipeline_mode<synchronous>, transform_indices = @transform_4, window_bounds = array<i64: 64, 256>}, {transform_indices = @transform_5, window_bounds = array<i64: 4, 8, 128>}, {pipeline_mode = #tpu.pipeline_mode<synchronous>, transform_indices = @transform_6, window_bounds = array<i64: 8, 64>}]} {
    %c0_i32 = arith.constant 0 : i32
    %0 = arith.cmpi eq, %arg0, %c0_i32 : i32
    %1 = arith.extui %0 : i1 to i32
    %c0_i32_0 = arith.constant 0 : i32
    %2 = arith.cmpi ne, %1, %c0_i32_0 : i32
    scf.if %2 {
      %cst_26 = arith.constant 0.000000e+00 : f32
      %24 = vector.broadcast %cst_26 : f32 to vector<8x64xf32>
      %c0_27 = arith.constant 0 : index
      %c0_28 = arith.constant 0 : index
      %25 = vector.load %arg9[%c0_27, %c0_28] : memref<8x64xf32, #tpu.memory_space<vmem>>, vector<8x64xf32>
      tpu.vector_store %arg9[%c0_27, %c0_28], %24 {strides = array<i32>} : memref<8x64xf32, #tpu.memory_space<vmem>>, vector<8x64xf32>,
      %cst_29 = arith.constant 0.000000e+00 : f32
      %26 = vector.broadcast %cst_29 : f32 to vector<8x64xf32>
      %c0_30 = arith.constant 0 : index
      %c0_31 = arith.constant 0 : index
      %27 = vector.load %arg10[%c0_30, %c0_31] : memref<8x64xf32, #tpu.memory_space<vmem>>, vector<8x64xf32>
      tpu.vector_store %arg10[%c0_30, %c0_31], %26 {strides = array<i32>} : memref<8x64xf32, #tpu.memory_space<vmem>>, vector<8x64xf32>,
    } else {
    }
    %c0 = arith.constant 0 : index
    %c0_1 = arith.constant 0 : index
    %3 = vector.load %arg1[%c0, %c0_1] : memref<32x32xbf16, #tpu.memory_space<vmem>>, vector<32x32xbf16>
    %c0_2 = arith.constant 0 : index
    %c0_3 = arith.constant 0 : index
    %4 = vector.load %arg3[%c0_2, %c0_3] : memref<32x256xbf16, #tpu.memory_space<vmem>>, vector<32x256xbf16>
    %cst = arith.constant dense<0.000000e+00> : vector<32x256xf32>
    %5 = tpu.matmul %3, %4, %cst {dimension_numbers = #tpu.dot_dimension_numbers<[1], [0], [0], [1], [0, 0, 1, 1], [], []>} : vector<32x32xbf16>, vector<32x256xbf16>, vector<32x256xf32> -> vector<32x256xf32>
    %c0_4 = arith.constant 0 : index
    %c0_5 = arith.constant 0 : index
    %6 = vector.load %arg4[%c0_4, %c0_5] : memref<1x256xf32, #tpu.memory_space<vmem>>, vector<1x256xf32>
    %7 = vector.broadcast %6 : vector<1x256xf32> to vector<32x256xf32>
    %8 = arith.addf %5, %7 : vector<32x256xf32>
    %9 = arith.truncf %8 : vector<32x256xf32> to vector<32x256xbf16>
    %c0_6 = arith.constant 0 : index
    %c0_7 = arith.constant 0 : index
    %10 = vector.load %arg8[%c0_6, %c0_7] : memref<32x256xbf16, #tpu.memory_space<vmem>>, vector<32x256xbf16>
    tpu.vector_store %arg8[%c0_6, %c0_7], %9 {strides = array<i32>} : memref<32x256xbf16, #tpu.memory_space<vmem>>, vector<32x256xbf16>,
    %c0_8 = arith.constant 0 : index
    %c0_9 = arith.constant 0 : index
    %11 = vector.load %arg5[%c0_8, %c0_9] : memref<64x256xbf16, #tpu.memory_space<vmem>>, vector<64x256xbf16>
    %c0_10 = arith.constant 0 : index
    %c0_11 = arith.constant 0 : index
    %12 = vector.load %arg2[%c0_10, %c0_11] : memref<8x1xi32, #tpu.memory_space<vmem>>, vector<8x1xi32>
    %c4_i32 = arith.constant 4 : i32
    %13 = arith.muli %arg0, %c4_i32 : i32
    %cst_12 = arith.constant 0.000000e+00 : f32
    %14 = vector.broadcast %cst_12 : f32 to vector<8x64xf32>
    %c0_13 = arith.constant 0 : index
    %c0_14 = arith.constant 0 : index
    %15 = vector.load %arg9[%c0_13, %c0_14] : memref<8x64xf32, #tpu.memory_space<vmem>>, vector<8x64xf32>
    %c0_15 = arith.constant 0 : index
    %c0_16 = arith.constant 0 : index
    %16 = vector.load %arg10[%c0_15, %c0_16] : memref<8x64xf32, #tpu.memory_space<vmem>>, vector<8x64xf32>
    %c0_i32_17 = arith.constant 0 : i32
    %c4_i32_18 = arith.constant 4 : i32
    %17 = arith.addi %c0_i32_17, %c4_i32_18 : i32
    %c1_i32 = arith.constant 1 : i32
    %18:2 = scf.for %arg11 = %c0_i32_17 to %17 step %c1_i32 iter_args(%arg12 = %15, %arg13 = %16) -> (vector<8x64xf32>, vector<8x64xf32>)  : i32 {
      %c8_i32 = arith.constant 8 : i32
      %24 = arith.muli %arg11, %c8_i32 : i32
      %25 = tpu.assume_multiple %24, 8 : i32
      %26 = arith.index_cast %25 : i32 to index
      %c0_26 = arith.constant 0 : index
      %27 = vector.load %arg8[%26, %c0_26] : memref<32x256xbf16, #tpu.memory_space<vmem>>, vector<8x256xbf16>
      %28 = arith.extf %27 : vector<8x256xbf16> to vector<8x256xf32>
      %29 = arith.truncf %arg12 : vector<8x64xf32> to vector<8x64xbf16>
      %cst_27 = arith.constant dense<0.000000e+00> : vector<8x256xf32>
      %30 = tpu.matmul %29, %11, %cst_27 {dimension_numbers = #tpu.dot_dimension_numbers<[1], [0], [0], [1], [0, 0, 1, 1], [], []>} : vector<8x64xbf16>, vector<64x256xbf16>, vector<8x256xf32> -> vector<8x256xf32>
      %31 = arith.addf %28, %30 : vector<8x256xf32>
      %32 = vector.extract_strided_slice %31 {offsets = [0, 0], sizes = [8, 192], strides = [1, 1]} : vector<8x256xf32> to vector<8x192xf32>
      %33 = arith.negf %32 : vector<8x192xf32>
      %34 = math.exp %33 : vector<8x192xf32>
      %cst_28 = arith.constant 1.000000e+00 : f32
      %35 = vector.broadcast %cst_28 : f32 to vector<8x192xf32>
      %36 = arith.addf %35, %34 : vector<8x192xf32>
      %37 = arith.divf %35, %36 : vector<8x192xf32>
      %38 = vector.extract_strided_slice %37 {offsets = [0, 0], sizes = [8, 64], strides = [1, 1]} : vector<8x192xf32> to vector<8x64xf32>
      %39 = vector.extract_strided_slice %37 {offsets = [0, 64], sizes = [8, 64], strides = [1, 1]} : vector<8x192xf32> to vector<8x64xf32>
      %40 = vector.extract_strided_slice %37 {offsets = [0, 128], sizes = [8, 64], strides = [1, 1]} : vector<8x192xf32> to vector<8x64xf32>
      %41 = vector.extract_strided_slice %31 {offsets = [0, 192], sizes = [8, 64], strides = [1, 1]} : vector<8x256xf32> to vector<8x64xf32>
      %42 = math.tanh %41 : vector<8x64xf32>
      %43 = arith.mulf %39, %arg13 : vector<8x64xf32>
      %44 = arith.mulf %38, %42 : vector<8x64xf32>
      %45 = arith.addf %43, %44 : vector<8x64xf32>
      %46 = math.tanh %45 : vector<8x64xf32>
      %47 = arith.mulf %40, %46 : vector<8x64xf32>
      %48 = arith.addi %13, %arg11 : i32
      %49 = vector.broadcast %48 : i32 to vector<8x1xi32>
      %50 = arith.cmpi sgt, %12, %49 : vector<8x1xi32>
      %51 = vector.shape_cast %50 : vector<8x1xi1> to vector<8x1xi1>
      %52 = vector.broadcast %51 : vector<8x1xi1> to vector<8x64xi1>
      %53 = arith.select %52, %47, %arg12 : vector<8x64xi1>, vector<8x64xf32>
      %54 = vector.shape_cast %50 : vector<8x1xi1> to vector<8x1xi1>
      %55 = vector.broadcast %54 : vector<8x1xi1> to vector<8x64xi1>
      %56 = arith.select %55, %45, %arg13 : vector<8x64xi1>, vector<8x64xf32>
      %cst_29 = arith.constant 0.000000e+00 : f32
      %57 = vector.shape_cast %50 : vector<8x1xi1> to vector<8x1xi1>
      %58 = vector.broadcast %57 : vector<8x1xi1> to vector<8x64xi1>
      %59 = vector.broadcast %cst_29 : f32 to vector<8x64xf32>
      %60 = arith.select %58, %47, %59 : vector<8x64xi1>, vector<8x64xf32>
      %61 = tpu.concatenate %60, %14 in 1 : vector<8x64xf32>, vector<8x64xf32> -> vector<8x128xf32>
      %62 = arith.index_cast %arg11 : i32 to index
      %c0_30 = arith.constant 0 : index
      %c0_31 = arith.constant 0 : index
      %63 = vector.load %arg6[%62, %c0_30, %c0_31] : memref<4x8x128xf32, #tpu.memory_space<vmem>>, vector<1x8x128xf32>
      %64 = vector.shape_cast %63 : vector<1x8x128xf32> to vector<8x128xf32>
      %65 = vector.shape_cast %61 : vector<8x128xf32> to vector<1x8x128xf32>
      tpu.vector_store %arg6[%62, %c0_30, %c0_31], %65 {strides = array<i32>} : memref<4x8x128xf32, #tpu.memory_space<vmem>>, vector<1x8x128xf32>,
      scf.yield %53, %56 : vector<8x64xf32>, vector<8x64xf32>
    }
    %c4_i32_19 = arith.constant 4 : i32
    %c0_20 = arith.constant 0 : index
    %c0_21 = arith.constant 0 : index
    %19 = vector.load %arg9[%c0_20, %c0_21] : memref<8x64xf32, #tpu.memory_space<vmem>>, vector<8x64xf32>
    tpu.vector_store %arg9[%c0_20, %c0_21], %18#0 {strides = array<i32>} : memref<8x64xf32, #tpu.memory_space<vmem>>, vector<8x64xf32>,
    %c0_22 = arith.constant 0 : index
    %c0_23 = arith.constant 0 : index
    %20 = vector.load %arg10[%c0_22, %c0_23] : memref<8x64xf32, #tpu.memory_space<vmem>>, vector<8x64xf32>
    tpu.vector_store %arg10[%c0_22, %c0_23], %18#1 {strides = array<i32>} : memref<8x64xf32, #tpu.memory_space<vmem>>, vector<8x64xf32>,
    %c1_i32_24 = arith.constant 1 : i32
    %21 = arith.cmpi eq, %arg0, %c1_i32_24 : i32
    %22 = arith.extui %21 : i1 to i32
    %c0_i32_25 = arith.constant 0 : i32
    %23 = arith.cmpi ne, %22, %c0_i32_25 : i32
    scf.if %23 {
      %c0_26 = arith.constant 0 : index
      %c0_27 = arith.constant 0 : index
      %24 = vector.load %arg7[%c0_26, %c0_27] : memref<8x64xf32, #tpu.memory_space<vmem>>, vector<8x64xf32>
      tpu.vector_store %arg7[%c0_26, %c0_27], %18#0 {strides = array<i32>} : memref<8x64xf32, #tpu.memory_space<vmem>>, vector<8x64xf32>,
    } else {
    }
    return
  }
  func.func @transform_0(%arg0: i32) -> (i32, i32) {
    %c0_i32 = arith.constant 0 : i32
    %c0_i32_0 = arith.constant 0 : i32
    return %arg0, %c0_i32 : i32, i32
  }
  func.func @transform_1(%arg0: i32) -> (i32, i32) {
    %c0_i32 = arith.constant 0 : i32
    %c0_i32_0 = arith.constant 0 : i32
    %c0_i32_1 = arith.constant 0 : i32
    return %c0_i32, %c0_i32_0 : i32, i32
  }
  func.func @transform_2(%arg0: i32) -> (i32, i32) {
    %c0_i32 = arith.constant 0 : i32
    %c0_i32_0 = arith.constant 0 : i32
    %c0_i32_1 = arith.constant 0 : i32
    return %c0_i32, %c0_i32_0 : i32, i32
  }
  func.func @transform_3(%arg0: i32) -> (i32, i32) {
    %c0_i32 = arith.constant 0 : i32
    %c0_i32_0 = arith.constant 0 : i32
    %c0_i32_1 = arith.constant 0 : i32
    return %c0_i32, %c0_i32_0 : i32, i32
  }
  func.func @transform_4(%arg0: i32) -> (i32, i32) {
    %c0_i32 = arith.constant 0 : i32
    %c0_i32_0 = arith.constant 0 : i32
    %c0_i32_1 = arith.constant 0 : i32
    return %c0_i32, %c0_i32_0 : i32, i32
  }
  func.func @transform_5(%arg0: i32) -> (i32, i32, i32) {
    %c0_i32 = arith.constant 0 : i32
    %c0_i32_0 = arith.constant 0 : i32
    %c0_i32_1 = arith.constant 0 : i32
    return %arg0, %c0_i32, %c0_i32_0 : i32, i32, i32
  }
  func.func @transform_6(%arg0: i32) -> (i32, i32) {
    %c0_i32 = arith.constant 0 : i32
    %c0_i32_0 = arith.constant 0 : i32
    %c0_i32_1 = arith.constant 0 : i32
    return %c0_i32, %c0_i32_0 : i32, i32
  }
}

</mosaic_0001>

<llo_original>
// kernel: tpu_custom_call.1
$region0: #{tpu_custom_call.1}
  #allocation0 [shape = 'u32[]', space=smem, size = 0x4, offset = 0x4, fixed_abs, tag = 'smem constant byte address 0x4 - core index']
  #allocation1 [shape = 'u32[144,128]{1,0:T(1,128)}', space=vmem, size = 0x12000, scoped, tag = 'internal scratch']
  #allocation2 [shape = 'bf16[32,256]{1,0:T(8,128)(2,1)}', space=vmem, size = 0x4000, scoped, tag = 'scratch operand']
  #allocation3 [shape = 'f32[8,64]{1,0:T(8,128)}', space=vmem, size = 0x1000, scoped, tag = 'scratch operand']
  #allocation4 [shape = 'f32[8,64]{1,0:T(8,128)}', space=vmem, size = 0x1000, scoped, tag = 'scratch operand']
  %s0 = inlined_call_operand.vmem [shape: bf16[64,32], index: 0, kind: input, shape index: {}]
  %s1 = inlined_call_operand.vmem [shape: s32[8,1], index: 1, kind: input, shape index: {}]
  %s2 = inlined_call_operand.hbm [shape: bf16[32,256], index: 2, kind: input, shape index: {}]
  %s3 = inlined_call_operand.hbm [shape: f32[1,256], index: 3, kind: input, shape index: {}]
  %s4 = inlined_call_operand.vmem [shape: bf16[64,256], index: 4, kind: input, shape index: {}]
  %s5 = inlined_call_operand.hbm [shape: f32[8,8,128], index: 5, kind: output, shape index: {0}]
  %s6 = inlined_call_operand.hbm [shape: f32[8,64], index: 6, kind: output, shape index: {1}]
  %7 = xla_tuple %s5, %s6
  %s8 = sld [smem:[#allocation0]]
  $region84: #{tpu_custom_call.1} parent=0
    _
  %s10 = ssub.s32 1, %s8
  %s11 = scalar_select 0, %s10, %s8
  $region1: #{tpu_custom_call.1} parent=0
    #allocation5 [shape = 'u8[16384]{0}', space=vmem, size = 0x4000, scoped, tag = 'input window, operand 2, single buffered']
    #allocation6 [shape = 's32[2]{0}', space=sflag, size = 0x8, scoped, tag = 'scoped memory for tpu_custom_call.1']
    #allocation7 [shape = 's32[2]{0}', space=sflag, size = 0x8, scoped, tag = 'scoped memory for tpu_custom_call.1']
    #allocation8 [shape = 'u8[1024]{0}', space=vmem, size = 0x400, scoped, tag = 'input window, operand 3, single buffered']
    #allocation9 [shape = 's32[1]{0}', space=sflag, size = 0x4, scoped, tag = 'scoped memory for tpu_custom_call.1']
    #allocation10 [shape = 'u8[32768]{0}', space=vmem, size = 0x8000, scoped, tag = 'output window, operand 0']
    #allocation11 [shape = 'u8[4096]{0}', space=vmem, size = 0x1000, scoped, tag = 'output window, operand 1, single buffered']
    #allocation12 [shape = 's32[1]{0}', space=sflag, size = 0x4, scoped, tag = 'scoped memory for tpu_custom_call.1']
    %12 = vsyncpa [#allocation6], 0
    %13 = vsyncpa [#allocation9], 0
    %14 = vsyncpa [#allocation7], 0
    %s15 = scalar_lea.sflag [#allocation7], 1
    %16 = vsyncpa %s15, 0
    %17 = vsyncpa [#allocation12], 0
    loop: start=0, step=1, limit=4
    $region2: #{tpu_custom_call.1} parent=1 // loop_pre_header
      _
    $region3: #{tpu_custom_call.1} parent=1 // loop_header
      %s19 = sphi 0, %s23
      %p20 = scmp.ge.s32.totalorder %s19, 4
      %s29 = sphi 0, %s31
      %s32 = sphi 0, %s29
      %s33 = sphi 0, %s32
      %s49 = sphi 0, %s33
      %s53 = sphi 0, %s53
      %s55 = sphi 0, %s53
      %s56 = sphi 0, %s55
      %s70 = sphi 0, %s56
      %s74 = sphi 0, %s74
      %s76 = sphi 0, %s74
      %s77 = sphi 0, %s76
      %s91 = sphi 0, %s77
      %s95 = sphi 0, %s95
      %s97 = sphi 0, %s95
      %s98 = sphi 0, %s97
      %s112 = sphi 0, %s98
      %s116 = sphi 0, %s116
      %s118 = sphi 0, %s116
      %s119 = sphi 0, %s118
      %s133 = sphi 0, %s119
      %s139 = sphi 0, %s141
      %s142 = sphi 0, %s139
      %s143 = sphi 0, %s142
      %s159 = sphi 0, %s143
      %s163 = sphi 0, %s163
      %s165 = sphi 0, %s163
      %s166 = sphi 0, %s165
      %s180 = sphi 0, %s166
    $region4: #{tpu_custom_call.1} parent=1 // loop_header_branch
      %22 = sbr.rel (%p20) target = $region8
    $region5: #{tpu_custom_call.1} parent=1 // loop_body
      %s24 = ssub.s32 %s19, 1
      %s25 = ssub.s32 %s19, 2
      %s26 = sadd.s32 %s19, 1
      %s27 = ssub.s32 %s19, %s26
      %p28 = scmp.eq.s32.totalorder %s27, 0
      %s30 = sadd.s32 %s29, 1
      %s31 = scalar_select %p28, %s29, %s30
      %p34 = pneg %p28
      %p35 = scmp.eq.s32.totalorder %s19, 1
      %p36 = por %p34, %p35
      %p37 = scmp.ne.s32.totalorder %s29, %s32
      %p38 = scmp.eq.s32.totalorder %s19, 0
      %p39 = por %p37, %p38
      %p40 = scmp.ne.s32.totalorder %s29, %s32
      %p41 = scmp.eq.s32.totalorder %s24, 1
      %p42 = por %p40, %p41
      %p43 = scmp.ne.s32.totalorder %s32, %s33
      %p44 = scmp.eq.s32.totalorder %s24, 0
      %p45 = por %p43, %p44
      %p46 = scmp.ne.s32.totalorder %s32, %s33
      %p47 = scmp.eq.s32.totalorder %s25, 1
      %p48 = por %p46, %p47
      %p50 = scmp.ne.s32.totalorder %s33, %s49
      %p51 = scmp.eq.s32.totalorder %s25, 0
      %p52 = por %p50, %p51
      %s54 = sadd.s32 %s53, 1
      %p57 = scmp.eq.s32.totalorder %s19, 1
      %p58 = scmp.ne.s32.totalorder %s53, %s55
      %p59 = scmp.eq.s32.totalorder %s19, 0
      %p60 = por %p58, %p59
      %p61 = scmp.ne.s32.totalorder %s53, %s55
      %p62 = scmp.eq.s32.totalorder %s24, 1
      %p63 = por %p61, %p62
      %p64 = scmp.ne.s32.totalorder %s55, %s56
      %p65 = scmp.eq.s32.totalorder %s24, 0
      %p66 = por %p64, %p65
      %p67 = scmp.ne.s32.totalorder %s55, %s56
      %p68 = scmp.eq.s32.totalorder %s25, 1
      %p69 = por %p67, %p68
      %p71 = scmp.ne.s32.totalorder %s56, %s70
      %p72 = scmp.eq.s32.totalorder %s25, 0
      %p73 = por %p71, %p72
      %s75 = sadd.s32 %s74, 1
      %p78 = scmp.eq.s32.totalorder %s19, 1
      %p79 = scmp.ne.s32.totalorder %s74, %s76
      %p80 = scmp.eq.s32.totalorder %s19, 0
      %p81 = por %p79, %p80
      %p82 = scmp.ne.s32.totalorder %s74, %s76
      %p83 = scmp.eq.s32.totalorder %s24, 1
      %p84 = por %p82, %p83
      %p85 = scmp.ne.s32.totalorder %s76, %s77
      %p86 = scmp.eq.s32.totalorder %s24, 0
      %p87 = por %p85, %p86
      %p88 = scmp.ne.s32.totalorder %s76, %s77
      %p89 = scmp.eq.s32.totalorder %s25, 1
      %p90 = por %p88, %p89
      %p92 = scmp.ne.s32.totalorder %s77, %s91
      %p93 = scmp.eq.s32.totalorder %s25, 0
      %p94 = por %p92, %p93
      %s96 = sadd.s32 %s95, 1
      %p99 = scmp.eq.s32.totalorder %s19, 1
      %p100 = scmp.ne.s32.totalorder %s95, %s97
      %p101 = scmp.eq.s32.totalorder %s19, 0
      %p102 = por %p100, %p101
      %p103 = scmp.ne.s32.totalorder %s95, %s97
      %p104 = scmp.eq.s32.totalorder %s24, 1
      %p105 = por %p103, %p104
      %p106 = scmp.ne.s32.totalorder %s97, %s98
      %p107 = scmp.eq.s32.totalorder %s24, 0
      %p108 = por %p106, %p107
      %p109 = scmp.ne.s32.totalorder %s97, %s98
      %p110 = scmp.eq.s32.totalorder %s25, 1
      %p111 = por %p109, %p110
      %p113 = scmp.ne.s32.totalorder %s98, %s112
      %p114 = scmp.eq.s32.totalorder %s25, 0
      %p115 = por %p113, %p114
      %s117 = sadd.s32 %s116, 1
      %p120 = scmp.eq.s32.totalorder %s19, 1
      %p121 = scmp.ne.s32.totalorder %s116, %s118
      %p122 = scmp.eq.s32.totalorder %s19, 0
      %p123 = por %p121, %p122
      %p124 = scmp.ne.s32.totalorder %s116, %s118
      %p125 = scmp.eq.s32.totalorder %s24, 1
      %p126 = por %p124, %p125
      %p127 = scmp.ne.s32.totalorder %s118, %s119
      %p128 = scmp.eq.s32.totalorder %s24, 0
      %p129 = por %p127, %p128
      %p130 = scmp.ne.s32.totalorder %s118, %s119
      %p131 = scmp.eq.s32.totalorder %s25, 1
      %p132 = por %p130, %p131
      %p134 = scmp.ne.s32.totalorder %s119, %s133
      %p135 = scmp.eq.s32.totalorder %s25, 0
      %p136 = por %p134, %p135
      %s137 = ssub.s32 %s19, %s26
      %p138 = scmp.eq.s32.totalorder %s137, 0
      %s140 = sadd.s32 %s139, 1
      %s141 = scalar_select %p138, %s139, %s140
      %p144 = pneg %p138
      %p145 = scmp.eq.s32.totalorder %s19, 1
      %p146 = por %p144, %p145
      %p147 = scmp.ne.s32.totalorder %s139, %s142
      %p148 = scmp.eq.s32.totalorder %s19, 0
      %p149 = por %p147, %p148
      %p150 = scmp.ne.s32.totalorder %s139, %s142
      %p151 = scmp.eq.s32.totalorder %s24, 1
      %p152 = por %p150, %p151
      %p153 = scmp.ne.s32.totalorder %s142, %s143
      %p154 = scmp.eq.s32.totalorder %s24, 0
      %p155 = por %p153, %p154
      %p156 = scmp.ne.s32.totalorder %s142, %s143
      %p157 = scmp.eq.s32.totalorder %s25, 1
      %p158 = por %p156, %p157
      %p160 = scmp.ne.s32.totalorder %s143, %s159
      %p161 = scmp.eq.s32.totalorder %s25, 0
      %p162 = por %p160, %p161
      %s164 = sadd.s32 %s163, 1
      %p167 = scmp.eq.s32.totalorder %s19, 1
      %p168 = scmp.ne.s32.totalorder %s163, %s165
      %p169 = scmp.eq.s32.totalorder %s19, 0
      %p170 = por %p168, %p169
      %p171 = scmp.ne.s32.totalorder %s163, %s165
      %p172 = scmp.eq.s32.totalorder %s24, 1
      %p173 = por %p171, %p172
      %p174 = scmp.ne.s32.totalorder %s165, %s166
      %p175 = scmp.eq.s32.totalorder %s24, 0
      %p176 = por %p174, %p175
      %p177 = scmp.ne.s32.totalorder %s165, %s166
      %p178 = scmp.eq.s32.totalorder %s25, 1
      %p179 = por %p177, %p178
      %p181 = scmp.ne.s32.totalorder %s166, %s180
      %p182 = scmp.eq.s32.totalorder %s25, 0
      %p183 = por %p181, %p182
      %p184 = scmp.le.s32.totalorder 1, %s19
      %p185 = scmp.lt.s32.totalorder %s19, 3
      %p186 = pnand %p184, %p185
      %p187 = pneg %p186
      // Predicated region
      $region9: #{tpu_custom_call.1} parent=5 // pred_check
        _
      $region10: #{tpu_custom_call.1} parent=5 // pred_check_branch
        %189 = sbr.rel (%p186) target = $region12
      $region11: #{tpu_custom_call.1} parent=5 // pred_region
        %s190 = ssub.s32 %s19, 1
        // Predicated region
        $region13: #{tpu_custom_call.1} parent=11 // pred_check
          %p191 = pneg %p66
        $region14: #{tpu_custom_call.1} parent=11 // pred_check_branch
          %193 = sbr.rel (%p191) target = $region16
        $region15: #{tpu_custom_call.1} parent=11 // pred_region
          _
        $region16: #{tpu_custom_call.1} parent=11 // pred_fallthru
          _
        // Predicated region
        $region17: #{tpu_custom_call.1} parent=11 // pred_check
          %p194 = pneg %p87
        $region18: #{tpu_custom_call.1} parent=11 // pred_check_branch
          %196 = sbr.rel (%p194) target = $region20
        $region19: #{tpu_custom_call.1} parent=11 // pred_region
          %s198 = ssub.s32 512, 512
          %199 = vsyncadd [#allocation6], %s198
          %s200 = sshll.u32 [#allocation5], 4
          %s201 = int_to_ptr.vmem [resolvable:$true] %s200
          %206 = dma.hbm_to_vmem [thread:$0]  %s2, 512, %s201, [#allocation6], 128, 128, 8
        $region20: #{tpu_custom_call.1} parent=11 // pred_fallthru
          _
        // Predicated region
        $region21: #{tpu_custom_call.1} parent=11 // pred_check
          %p207 = pneg %p108
        $region22: #{tpu_custom_call.1} parent=11 // pred_check_branch
          %209 = sbr.rel (%p207) target = $region24
        $region23: #{tpu_custom_call.1} parent=11 // pred_region
          %s211 = ssub.s32 32, 32
          %212 = vsyncadd [#allocation9], %s211
          %s214 = sshll.u32 [#allocation8], 4
          %s215 = int_to_ptr.vmem [resolvable:$true] %s214
          %217 = dma.hbm_to_vmem [thread:$0]  %s3, 32, %s215, [#allocation9]
        $region24: #{tpu_custom_call.1} parent=11 // pred_fallthru
          _
        // Predicated region
        $region25: #{tpu_custom_call.1} parent=11 // pred_check
          %p218 = pneg %p129
        $region26: #{tpu_custom_call.1} parent=11 // pred_check_branch
          %220 = sbr.rel (%p218) target = $region28
        $region27: #{tpu_custom_call.1} parent=11 // pred_region
          _
        $region28: #{tpu_custom_call.1} parent=11 // pred_fallthru
          _
      $region12: #{tpu_custom_call.1} parent=5 // pred_fallthru
        _
      %p221 = scmp.lt.s32.totalorder %s19, 2
      // Predicated region
      $region29: #{tpu_custom_call.1} parent=5 // pred_check
        %p222 = pneg %p221
      $region30: #{tpu_custom_call.1} parent=5 // pred_check_branch
        %224 = sbr.rel (%p222) target = $region32
      $region31: #{tpu_custom_call.1} parent=5 // pred_region
        // Predicated region
        $region33: #{tpu_custom_call.1} parent=31 // pred_check
          %p225 = pneg %p39
        $region34: #{tpu_custom_call.1} parent=31 // pred_check_branch
          %227 = sbr.rel (%p225) target = $region36
        $region35: #{tpu_custom_call.1} parent=31 // pred_region
          %s228 = smul.u32 4, %s19
          %p229 = scmp.lt.s32.totalorder %s228, 7
          %s230 = scalar_select %p229, %s228, 7
          %s231 = smul.addr %s230, 4
          %s232 = scalar_lea.vmem %s0, %s231
          %s233 = smul.u32 4, %s19
        $region36: #{tpu_custom_call.1} parent=31 // pred_fallthru
          _
      $region32: #{tpu_custom_call.1} parent=5 // pred_fallthru
        _
      %p234 = scmp.le.s32.totalorder 1, %s19
      %p235 = scmp.lt.s32.totalorder %s19, 3
      %p236 = pnand %p234, %p235
      %p237 = pneg %p236
      // Predicated region
      $region37: #{tpu_custom_call.1} parent=5 // pred_check
        _
      $region38: #{tpu_custom_call.1} parent=5 // pred_check_branch
        %239 = sbr.rel (%p236) target = $region40
      $region39: #{tpu_custom_call.1} parent=5 // pred_region
        %s240 = ssub.s32 %s19, 1
        // Predicated region
        $region41: #{tpu_custom_call.1} parent=39 // pred_check
          %p241 = pneg %p87
        $region42: #{tpu_custom_call.1} parent=39 // pred_check_branch
          %243 = sbr.rel (%p241) target = $region44
        $region43: #{tpu_custom_call.1} parent=39 // pred_region
          %244 = dma.done [#allocation6], 512
        $region44: #{tpu_custom_call.1} parent=39 // pred_fallthru
          _
        // Predicated region
        $region45: #{tpu_custom_call.1} parent=39 // pred_check
          %p245 = pneg %p108
        $region46: #{tpu_custom_call.1} parent=39 // pred_check_branch
          %247 = sbr.rel (%p245) target = $region48
        $region47: #{tpu_custom_call.1} parent=39 // pred_region
          %248 = dma.done [#allocation9], 32
        $region48: #{tpu_custom_call.1} parent=39 // pred_fallthru
          _
        %s249 = smul.u32 4, %s24
        %p250 = scmp.lt.s32.totalorder %s249, 7
        %s251 = scalar_select %p250, %s249, 7
        %s252 = smul.addr %s251, 4
        %s253 = scalar_lea.vmem %s0, %s252
        %p254 = pneg %p45
        %p255 = pneg %p42
        %p256 = pneg %p66
        %p257 = pneg %p63
        %p258 = pneg %p87
        %p259 = pneg %p84
        %p260 = pneg %p108
        %p261 = pneg %p105
        %p262 = pneg %p129
        %p263 = pneg %p126
        %p264 = pneg %p155
        %p265 = pneg %p152
        %s266 = sand.u32 %s142, 1
        %s267 = scalar_lea.sflag [#allocation7], %s266
        %s268 = sand.u32 %s142, 1
        %s269 = smul.addr %s268, 32
        %s270 = scalar_lea.vmem [#allocation10], %s269
        %p271 = pneg %p176
        %p272 = pneg %p173
        %s273 = smul.u32 4, %s24
        %p274 = scmp.lt.s32.totalorder %s273, 7
        %s275 = scalar_select %p274, %s273, 7
        %s276 = smul.addr %s275, 4
        %s277 = scalar_lea.vmem %s0, %s276
        %s278 = smul.u32 4, %s24
        %s279 = smul.u32 4, %s24
        %p281 = scmp.eq.s32.totalorder %s24, 0
        // Predicated region
        $region49: #{tpu_custom_call.1} parent=39 // pred_check
          %p282 = pneg %p281
        $region50: #{tpu_custom_call.1} parent=39 // pred_check_branch
          %284 = sbr.rel (%p282) target = $region52
        $region51: #{tpu_custom_call.1} parent=39 // pred_region
          %vm285 = vcmask 523264
          %286 = vst.msk [vmem:[#allocation3] sm:$0xff] %vm285, 0.0
          %287 = vst.msk [vmem:[#allocation4] sm:$0xff] %vm285, 0.0
        $region52: #{tpu_custom_call.1} parent=39 // pred_fallthru
          _
        %v288 = vld [vmem:[%s277] sm:$0xf]
        %v289 = vld [vmem:[%s277 + $0x4] sm:$0xf]
        %v290 = vld [vmem:[%s277 + $0x8] sm:$0xf]
        %v291 = vld [vmem:[%s277 + $0xc] sm:$0xf]
        %v292 = vld [vmem:[#allocation5] sm:$0xff]
        %v293 = vld [vmem:[#allocation5 + $0x8] sm:$0xff]
        %v294 = vld [vmem:[#allocation5 + $0x10] sm:$0xff]
        %v295 = vld [vmem:[#allocation5 + $0x18] sm:$0xff]
        %v296 = vld [vmem:[#allocation8] sm:$0x3]
        %v298 = vlaneseq
        %v299 = vshrl.u32 %v298, 7
        %v300 = vsub.s32 0, %v299
        %v301 = vrot.slane %v296, %v300
        %v302 = vlaneseq
        %v303 = vshrl.u32 %v302, 7
        %v304 = vsub.s32 1, %v303
        %v305 = vrot.slane %v296, %v304
        %v312 = vunpack.c.l.b16 %v288
        %v313 = vunpack.c.l.b16 %v289
        %v314 = vunpack.c.l.b16 %v290
        %v315 = vunpack.c.l.b16 %v291
        %v316 = vpack.c.b16 %v313, %v312
        %v317 = vpack.c.b16 %v315, %v314
        %v322 = vunpack.c.l.b16 %v292
        %v323 = vunpack.c.h.b16 %v292
        %v324 = vunpack.c.l.b16 %v293
        %v325 = vunpack.c.h.b16 %v293
        %v326 = vunpack.c.l.b16 %v294
        %v327 = vunpack.c.h.b16 %v294
        %v328 = vunpack.c.l.b16 %v295
        %v329 = vunpack.c.h.b16 %v295
        %v330 = vpack.c.b16 %v324, %v322
        %v331 = vpack.c.b16 %v325, %v323
        %v332 = vpack.c.b16 %v328, %v326
        %v333 = vpack.c.b16 %v329, %v327
        %vm338 = vcmask 261120
        %v340 = vsel %vm338, %v316, 0
        %v343 = vsel %vm338, %v317, 0
        %345 = vmatprep.subr.bf16.mxu0 0
        %346 = vmatpush1.bf16.msra.mxu0 0
        %347 = vmatprep.subr.bf16.mxu0 0
        %348 = vmatpush1.bf16.msra.mxu0 0
        %349 = vmatprep.subr.bf16.mxu0 0
        %350 = vmatpush1.bf16.msra.mxu0 0
        %351 = vmatprep.subr.bf16.mxu0 0
        %352 = vmatpush1.bf16.msra.mxu0 0
        %353 = vmatprep.subr.bf16.mxu0 0
        %354 = vmatpush1.bf16.msra.mxu0 0
        %355 = vmatprep.subr.bf16.mxu0 0
        %356 = vmatpush1.bf16.msra.mxu0 0
        %357 = vmatprep.subr.bf16.mxu0 %v333
        %358 = vmatpush1.bf16.msra.mxu0 %v332
        %359 = vmatprep.subr.bf16.mxu0 %v331
        %360 = vmatpush1.bf16.msra.mxu0 %v330
        %361 = vmatprep.subr.bf16.mxu0 0
        %362 = vmatpush2.bf16.msra.mxu0 0
        %363 = vmatprep.subr.bf16.mxu0 0
        %364 = vmatpush2.bf16.msra.mxu0 0
        %365 = vmatprep.subr.bf16.mxu0 0
        %366 = vmatpush2.bf16.msra.mxu0 0
        %367 = vmatprep.subr.bf16.mxu0 0
        %368 = vmatpush2.bf16.msra.mxu0 0
        %369 = vmatprep.subr.bf16.mxu0 0
        %370 = vmatpush2.bf16.msra.mxu0 0
        %371 = vmatprep.subr.bf16.mxu0 0
        %372 = vmatpush2.bf16.msra.mxu0 0
        %373 = vmatprep.subr.bf16.mxu0 0
        %374 = vmatpush2.bf16.msra.mxu0 0
        %375 = vmatprep.subr.bf16.mxu0 0
        %376 = vmatpush2.bf16.msra.mxu0 0
        %377 = vmatprep.mubr.bf16.mxu0 0
        %378 = vmatmul.mubr.bf16.gmra.mxu0 %v340
        %v379 = vpop.f32.mrf.mxu0
        %v380 = vadd.f32 %v301, %v379
        %v381 = vpop.f32.mrf.mxu0
        %v382 = vadd.f32 %v305, %v381
        %v383 = vpop.f32.mrf.mxu0
        %v384 = vadd.f32 %v301, %v383
        %v385 = vpop.f32.mrf.mxu0
        %v386 = vadd.f32 %v305, %v385
        %387 = vmatprep.mubr.bf16.mxu0 0
        %388 = vmatmul.mubr.bf16.gmra.mxu0 %v343
        %v389 = vpop.f32.mrf.mxu0
        %v390 = vadd.f32 %v301, %v389
        %v391 = vpop.f32.mrf.mxu0
        %v392 = vadd.f32 %v305, %v391
        %v393 = vpop.f32.mrf.mxu0
        %v394 = vadd.f32 %v301, %v393
        %v395 = vpop.f32.mrf.mxu0
        %v396 = vadd.f32 %v305, %v395
        %397 = vdwg.mxu0
        %v398 = vpack.c.bf16 %v384, %v380
        %v399 = vpack.c.bf16 %v386, %v382
        %v400 = vpack.c.bf16 %v394, %v390
        %v401 = vpack.c.bf16 %v396, %v392
        %v406 = vunpack.c.l.b16 %v398
        %v407 = vunpack.c.l.b16 %v399
        %v408 = vunpack.c.h.b16 %v398
        %v409 = vunpack.c.h.b16 %v399
        %v410 = vunpack.c.l.b16 %v400
        %v411 = vunpack.c.l.b16 %v401
        %v412 = vunpack.c.h.b16 %v400
        %v413 = vunpack.c.h.b16 %v401
        %v414 = vpack.c.b16 %v407, %v406
        %v415 = vpack.c.b16 %v409, %v408
        %v416 = vpack.c.b16 %v411, %v410
        %v417 = vpack.c.b16 %v413, %v412
        %422 = vst [vmem:[#allocation2] sm:$0xff] %v414
        %423 = vst [vmem:[#allocation2 + $0x8] sm:$0xff] %v415
        %424 = vst [vmem:[#allocation2 + $0x10] sm:$0xff] %v416
        %425 = vst [vmem:[#allocation2 + $0x18] sm:$0xff] %v417
        %v426 = vld [vmem:[%s4] sm:$0xff]
        %v427 = vld [vmem:[%s4 + $0x8] sm:$0xff]
        %v428 = vld [vmem:[%s4 + $0x10] sm:$0xff]
        %v429 = vld [vmem:[%s4 + $0x18] sm:$0xff]
        %v430 = vld [vmem:[%s4 + $0x20] sm:$0xff]
        %v431 = vld [vmem:[%s4 + $0x28] sm:$0xff]
        %v432 = vld [vmem:[%s4 + $0x30] sm:$0xff]
        %v433 = vld [vmem:[%s4 + $0x38] sm:$0xff]
        %v434 = vld [vmem:[%s1] sm:$0xff]
        %s435 = smul.u32 %s24, 4
        %v436 = vld [vmem:[#allocation3] sm:$0xff]
        %v437 = vld [vmem:[#allocation4] sm:$0xff]
        loop: start=0, step=1, limit=4
        $region53: #{tpu_custom_call.1} parent=39 // loop_pre_header
          _
        $region54: #{tpu_custom_call.1} parent=39 // loop_header
          %s439 = sphi 0, %s443
          %p440 = scmp.ge.s32.totalorder %s439, 4
          %v444 = vphi %v436, %v585
          %v445 = vphi %v437, %v593
        $region55: #{tpu_custom_call.1} parent=39 // loop_header_branch
          %442 = sbr.rel (%p440) target = $region59
        $region56: #{tpu_custom_call.1} parent=39 // loop_body
          %s446 = smul.u32 %s439, 8
          %s447 = sshra.s32 %s446, 3
          %s448 = sand.u32 %s446, 7
          %s449 = smul.u32 %s447, 2
          %s450 = smul.addr %s449, 4
          %s451 = scalar_lea.vmem [#allocation2], %s450
          %v452 = vld [vmem:[%s451] sm:$0xff]
          %v453 = vunpack.c.l.bf16 %v452
          %v454 = vunpack.c.h.bf16 %v452
          %v455 = vpack.c.bf16 %v444, %v444
          %v464 = vunpack.c.l.b16 %v426
          %v465 = vunpack.c.h.b16 %v426
          %v466 = vunpack.c.l.b16 %v427
          %v467 = vunpack.c.h.b16 %v427
          %v468 = vunpack.c.l.b16 %v428
          %v469 = vunpack.c.h.b16 %v428
          %v470 = vunpack.c.l.b16 %v429
          %v471 = vunpack.c.h.b16 %v429
          %v472 = vunpack.c.l.b16 %v430
          %v473 = vunpack.c.h.b16 %v430
          %v474 = vunpack.c.l.b16 %v431
          %v475 = vunpack.c.h.b16 %v431
          %v476 = vunpack.c.l.b16 %v432
          %v477 = vunpack.c.h.b16 %v432
          %v478 = vunpack.c.l.b16 %v433
          %v479 = vunpack.c.h.b16 %v433
          %v480 = vpack.c.b16 %v466, %v464
          %v481 = vpack.c.b16 %v467, %v465
          %v482 = vpack.c.b16 %v470, %v468
          %v483 = vpack.c.b16 %v471, %v469
          %v484 = vpack.c.b16 %v474, %v472
          %v485 = vpack.c.b16 %v475, %v473
          %v486 = vpack.c.b16 %v478, %v476
          %v487 = vpack.c.b16 %v479, %v477
          %vm496 = vcmask 523264
          %v498 = vsel %vm496, %v455, 0
          %500 = vmatprep.subr.bf16.mxu0 0
          %501 = vmatpush1.bf16.msra.mxu0 0
          %502 = vmatprep.subr.bf16.mxu0 0
          %503 = vmatpush1.bf16.msra.mxu0 0
          %504 = vmatprep.subr.bf16.mxu0 0
          %505 = vmatpush1.bf16.msra.mxu0 0
          %506 = vmatprep.subr.bf16.mxu0 0
          %507 = vmatpush1.bf16.msra.mxu0 0
          %508 = vmatprep.subr.bf16.mxu0 %v487
          %509 = vmatpush1.bf16.msra.mxu0 %v486
          %510 = vmatprep.subr.bf16.mxu0 %v485
          %511 = vmatpush1.bf16.msra.mxu0 %v484
          %512 = vmatprep.subr.bf16.mxu0 %v483
          %513 = vmatpush1.bf16.msra.mxu0 %v482
          %514 = vmatprep.subr.bf16.mxu0 %v481
          %515 = vmatpush1.bf16.msra.mxu0 %v480
          %516 = vmatprep.subr.bf16.mxu0 0
          %517 = vmatpush2.bf16.msra.mxu0 0
          %518 = vmatprep.subr.bf16.mxu0 0
          %519 = vmatpush2.bf16.msra.mxu0 0
          %520 = vmatprep.subr.bf16.mxu0 0
          %521 = vmatpush2.bf16.msra.mxu0 0
          %522 = vmatprep.subr.bf16.mxu0 0
          %523 = vmatpush2.bf16.msra.mxu0 0
          %524 = vmatprep.subr.bf16.mxu0 0
          %525 = vmatpush2.bf16.msra.mxu0 0
          %526 = vmatprep.subr.bf16.mxu0 0
          %527 = vmatpush2.bf16.msra.mxu0 0
          %528 = vmatprep.subr.bf16.mxu0 0
          %529 = vmatpush2.bf16.msra.mxu0 0
          %530 = vmatprep.subr.bf16.mxu0 0
          %531 = vmatpush2.bf16.msra.mxu0 0
          %532 = vmatprep.mubr.bf16.mxu0 0
          %533 = vmatmul.mubr.bf16.gmra.mxu0 %v498
          %v534 = vpop.f32.mrf.mxu0
          %v535 = vadd.f32 0.0, %v534
          %v536 = vpop.f32.mrf.mxu0
          %v537 = vadd.f32 0.0, %v536
          %v538 = vpop.f32.mrf.mxu0
          %v539 = vpop.f32.mrf.mxu0
          %540 = vdwg.mxu0
          %v541 = vadd.f32 %v453, %v535
          %v542 = vadd.f32 %v454, %v537
          %v543 = vxor.u32 %v541, 2147483648
          %v544 = vxor.u32 %v542, 2147483648
          %v545 = vmul.f32 %v543, 1.442695
          %v546 = vpow.pop %v545
          %v547 = vmul.f32 %v544, 1.442695
          %v548 = vpow.pop %v547
          %v549 = vadd.f32 %v546, 1.0
          %v550 = vadd.f32 %v548, 1.0
          %v551 = vrcp.pop %v549
          %v552 = vmul.f32 1.0, %v551
          %v553 = vrcp.pop %v550
          %v554 = vmul.f32 1.0, %v553
          %v555 = vtanh.pop %v542
          %557 = vrot.lane.b32.xlu0 %v445, 64
          %v558 = vpop.permute.xlu0 %557
          %v560 = vmul.f32 %v552, %v558
          %562 = vrot.lane.b32.xlu0 %v555, 64
          %v563 = vpop.permute.xlu0 %562
          %v565 = vmul.f32 %v552, %v563
          %567 = vrot.lane.b32.xlu0 %v565, 64
          %v568 = vpop.permute.xlu0 %567
          %v570 = vadd.f32 %v560, %v568
          %v571 = vtanh.pop %v570
          %573 = vrot.lane.b32.xlu0 %v571, 64
          %v574 = vpop.permute.xlu0 %573
          %v576 = vmul.f32 %v554, %v574
          %s577 = sadd.s32 %s435, %s439
          %v578 = vstv %s577
          %vm579 = vcmp.gt.s32.totalorder %v434, %v578
          %v580 = vsel %vm579, 1, 0
          %581 = vset.pattern.permute.xlu0 0
          %582 = vperm.xlu0 %581, %v580
          %v583 = vpop.permute.xlu0 %582
          %vm584 = vcmp.eq.s32.totalorder %v583, 1
          %v585 = vsel %vm584, %v576, %v444
          %v586 = vsel %vm584, %v570, %v558
          %v587 = vsel %vm584, %v576, 0.0
          %v588 = vsel %vm496, %v587, 0.0
          %s589 = scalar_lea.vmem %s270, %s446 [#allocation10]
          %590 = vst [vmem:[%s589] sm:$0xff] %v588
          %592 = vrot.lane.b32.xlu0 %v586, 64
          %v593 = vpop.permute.xlu0 %592
        $region57: #{tpu_custom_call.1} parent=39 // loop_footer
          %s443 = sadd.s32 1, %s439
        $region58: #{tpu_custom_call.1} parent=39 // loop_footer_branch
          %438 = sbr.rel target = $region54
        $region59: #{tpu_custom_call.1} parent=39 // loop_exit
          _
        %vm595 = vcmask 523264
        %596 = vst.msk [vmem:[#allocation3] sm:$0xff] %vm595, %v444
        %597 = vst.msk [vmem:[#allocation4] sm:$0xff] %vm595, %v445
        %p598 = scmp.eq.s32.totalorder %s24, 1
        // Predicated region
        $region60: #{tpu_custom_call.1} parent=39 // pred_check
          %p599 = pneg %p598
        $region61: #{tpu_custom_call.1} parent=39 // pred_check_branch
          %601 = sbr.rel (%p599) target = $region63
        $region62: #{tpu_custom_call.1} parent=39 // pred_region
          %602 = vst.msk [vmem:[#allocation11] sm:$0xff] %vm595, %v444
        $region63: #{tpu_custom_call.1} parent=39 // pred_fallthru
          _
        %s603 = sand.u32 %s142, 1
        %s604 = scalar_lea.sflag [#allocation7], %s603
        %s605 = sand.u32 %s142, 1
        %s606 = smul.addr %s605, 32
        %s607 = scalar_lea.vmem [#allocation10], %s606
        // Predicated region
        $region64: #{tpu_custom_call.1} parent=39 // pred_check
          %p608 = pneg %p152
        $region65: #{tpu_custom_call.1} parent=39 // pred_check_branch
          %610 = sbr.rel (%p608) target = $region67
        $region66: #{tpu_custom_call.1} parent=39 // pred_region
          %s611 = smul.u32 4, %s24
          %s613 = ssub.s32 512, 512
          %614 = vsyncadd %s604, %s613
          %s615 = smul.addr %s611, 128
          %s616 = scalar_lea.hbm %s5, %s615
          %s617 = sshll.u32 %s607, 4
          %s618 = int_to_ptr.vmem [resolvable:$true] %s617
          %623 = dma.vmem_to_hbm [thread:$0]  %s618, 512, %s616, %s604, 128, 128, 8
        $region67: #{tpu_custom_call.1} parent=39 // pred_fallthru
          _
        // Predicated region
        $region68: #{tpu_custom_call.1} parent=39 // pred_check
          %p624 = pneg %p173
        $region69: #{tpu_custom_call.1} parent=39 // pred_check_branch
          %626 = sbr.rel (%p624) target = $region71
        $region70: #{tpu_custom_call.1} parent=39 // pred_region
          %s628 = ssub.s32 128, 128
          %629 = vsyncadd [#allocation12], %s628
          %s631 = sshll.u32 [#allocation11], 4
          %s632 = int_to_ptr.vmem [resolvable:$true] %s631
          %634 = dma.vmem_to_hbm [thread:$0]  %s632, 128, %s6, [#allocation12]
        $region71: #{tpu_custom_call.1} parent=39 // pred_fallthru
          _
        // Predicated region
        $region72: #{tpu_custom_call.1} parent=39 // pred_check
          %p635 = pneg %p173
        $region73: #{tpu_custom_call.1} parent=39 // pred_check_branch
          %637 = sbr.rel (%p635) target = $region75
        $region74: #{tpu_custom_call.1} parent=39 // pred_region
          %638 = dma.done [#allocation12], 128
        $region75: #{tpu_custom_call.1} parent=39 // pred_fallthru
          _
      $region40: #{tpu_custom_call.1} parent=5 // pred_fallthru
        _
      %p639 = scmp.le.s32.totalorder 2, %s19
      // Predicated region
      $region76: #{tpu_custom_call.1} parent=5 // pred_check
        %p640 = pneg %p639
      $region77: #{tpu_custom_call.1} parent=5 // pred_check_branch
        %642 = sbr.rel (%p640) target = $region79
      $region78: #{tpu_custom_call.1} parent=5 // pred_region
        %s643 = ssub.s32 %s19, 2
        // Predicated region
        $region80: #{tpu_custom_call.1} parent=78 // pred_check
          %p644 = pneg %p158
        $region81: #{tpu_custom_call.1} parent=78 // pred_check_branch
          %646 = sbr.rel (%p644) target = $region83
        $region82: #{tpu_custom_call.1} parent=78 // pred_region
          %s647 = sand.u32 %s143, 1
          %s648 = scalar_lea.sflag [#allocation7], %s647
          %s649 = sand.u32 %s143, 1
          %s650 = smul.addr %s649, 32
          %s651 = scalar_lea.vmem [#allocation10], %s650
          %652 = dma.done %s648, 512
        $region83: #{tpu_custom_call.1} parent=78 // pred_fallthru
          _
      $region79: #{tpu_custom_call.1} parent=5 // pred_fallthru
        _
    $region6: #{tpu_custom_call.1} parent=1 // loop_footer
      %s23 = sadd.s32 1, %s19
    $region7: #{tpu_custom_call.1} parent=1 // loop_footer_branch
      %18 = sbr.rel target = $region3
    $region8: #{tpu_custom_call.1} parent=1 // loop_exit
      _
    %653 = vsyncpa [#allocation6], 1
    %s654 = scalar_lea.sflag [#allocation6], 1
    %655 = vsyncpa %s654, 1
    %656 = vsyncpa [#allocation9], 1
    %657 = vsyncpa [#allocation7], 1
    %s658 = scalar_lea.sflag [#allocation7], 1
    %659 = vsyncpa %s658, 1
    %660 = vsyncpa [#allocation12], 1

</llo_original>
